<compile_context>
chip_gen: v6e
topology: v6e:2x2x1
jax: 0.10.0
libtpu: 0.0.40
codegen_flags: <defaults>
</compile_context>

<pallas_src>
import functools

import jax
import jax.numpy as jnp
from jax import lax
from jax.experimental import pallas as pl
from jax.experimental.pallas import tpu as pltpu


def _maxpool3x3_kernel(x_ref, up_ref, dn_ref, o_ref, *, c):
    """3x3 max (stride 1, -inf border) on one (1, tH, W*C) tile of an NHWC map.

    The minor axis is the flattened (W, C) pair, so +-1 pixel in W is a +-c
    lane shift (channels never mix).  up_ref / dn_ref are 8-row slabs of the
    same array containing the one-row halo above / below this tile.
    """
    _, th, wc = x_ref.shape
    h_id = pl.program_id(1)
    n_h = pl.num_programs(1)

    x = x_ref[0]                                         # (tH, W*C)
    neg_inf = jnp.array(-jnp.inf, dtype=x.dtype)

    # One-row halos: last row of the slab above, first row of the slab below.
    # Outside the image they become -inf (MaxPool2d's implicit max padding).
    above = jnp.where(h_id == 0, neg_inf, up_ref[0][7:8, :])        # (1, W*C)
    below = jnp.where(h_id == n_h - 1, neg_inf, dn_ref[0][0:1, :])  # (1, W*C)

    # Vertical pass: max over rows (r-1, r, r+1).  Sublane rolls + row-iota
    # patches instead of concatenates -> no block-sized VMEM temporaries.
    row = lax.broadcasted_iota(jnp.int32, (th, 1), 0)
    up = jnp.where(row == 0, above, pltpu.roll(x, 1, axis=0))            # x[r-1]
    dn = jnp.where(row == th - 1, below, pltpu.roll(x, th - 1, axis=0))  # x[r+1]
    v = jnp.maximum(jnp.maximum(up, x), dn)

    # Horizontal pass: max over pixels (w-1, w, w+1) == +-c lane shifts.
    lane = lax.broadcasted_iota(jnp.int32, (1, wc), 1)
    if wc == c:                      # W == 1: no horizontal neighbours at all
        left = jnp.full_like(v, neg_inf)
        right = jnp.full_like(v, neg_inf)
    elif wc % 128 == 0:
        left = pltpu.roll(v, c, axis=1)                  # v[.., w-1, .]
        right = pltpu.roll(v, wc - c, axis=1)            # v[.., w+1, .]
    else:
        # Lane width not vreg-aligned: fall back to slice+concat shifts.
        pad = jnp.full((th, c), neg_inf, dtype=v.dtype)
        left = jnp.concatenate([pad, v[:, : wc - c]], axis=1)
        right = jnp.concatenate([v[:, c:], pad], axis=1)
    left = jnp.where(lane < c, neg_inf, left)            # w-1 invalid at w == 0
    right = jnp.where(lane >= wc - c, neg_inf, right)    # w+1 invalid at w == W-1
    o_ref[0] = jnp.maximum(jnp.maximum(left, v), right)


def _pick_tile_h(h, n, wc, itemsize, *, target_steps=4, max_block_bytes=2 << 20):
    """Largest multiple-of-8 divisor of H whose tile fits the VMEM budget and
    still yields >= target_steps grid steps (pipelining + both v7x TCs)."""
    cands = sorted((t for t in range(8, h + 1, 8) if h % t == 0), reverse=True)
    fitting = [t for t in cands if t * wc * itemsize <= max_block_bytes] or [8]
    for t in fitting:
        if n * (h // t) >= target_steps:
            return t
    return fitting[-1]


def _maxpool3x3_nhwc(x_nhwc):
    """MaxPool2d(3, stride=1, padding=1) over the H, W axes of an NHWC array."""
    n, h, w, ch = x_nhwc.shape
    wc = w * ch
    if x_nhwc.dtype != jnp.float32 or h % 8 != 0:
        # TODO(synk): support non-f32 dtypes / heights not a multiple of 8 in
        # the Pallas path (needs dtype-min padding + ragged-row masking).
        return lax.reduce_window(
            x_nhwc, -jnp.inf, lax.max, (1, 3, 3, 1), (1, 1, 1, 1),
            padding=((0, 0), (1, 1), (1, 1), (0, 0)))

    itemsize = jnp.dtype(x_nhwc.dtype).itemsize
    x_flat = x_nhwc.reshape(n, h, wc)            # free: same HBM layout
    t_h = _pick_tile_h(h, n, wc, itemsize)
    n_h = h // t_h
    k = t_h // 8                                 # tile height in 8-row slabs
    h8 = h // 8                                  # number of 8-row slabs in H

    # Explicit VMEM budget: ~3/4 of physical (48 MiB on v7x, 96 MiB on v5e/v6e).
    try:
        vmem_cap = pltpu.get_tpu_info().vmem_capacity_bytes
        vmem_limit = min(int(vmem_cap * 3 // 4), 100 * 1024 * 1024)
    except Exception:
        vmem_limit = 48 * 1024 * 1024            # safe under v7x's 64 MiB

    cost = pl.CostEstimate(
        flops=8 * n * h * wc,                    # 8 maxima per output element
        transcendentals=0,
        bytes_accessed=(2 * n * h * wc + n * n_h * 16 * wc) * itemsize)

    out_flat = pl.pallas_call(
        functools.partial(_maxpool3x3_kernel, c=ch),
        out_shape=jax.ShapeDtypeStruct((n, h, wc), x_nhwc.dtype),
        grid=(n, n_h),
        in_specs=[
            # Centre tile.
            pl.BlockSpec((1, t_h, wc), lambda b, i: (b, i, 0)),
            # 8-row slab whose last row is the halo above (clamped at top).
            pl.BlockSpec((1, 8, wc),
                         lambda b, i: (b, jnp.maximum(i * k - 1, 0), 0)),
            # 8-row slab whose first row is the halo below (clamped at bottom).
            pl.BlockSpec((1, 8, wc),
                         lambda b, i: (b, jnp.minimum((i + 1) * k, h8 - 1), 0)),
        ],
        out_specs=pl.BlockSpec((1, t_h, wc), lambda b, i: (b, i, 0)),
        compiler_params=pltpu.CompilerParams(
            dimension_semantics=("parallel", "parallel"),
            vmem_limit_bytes=vmem_limit),
        cost_estimate=cost,
    )(x_flat, x_flat, x_flat)
    return out_flat.reshape(n, h, w, ch)


@jax.jit
def heatmap_maxpool_and_permute(heatmap, part_affinity_fields):
    """Mirror of HeatmapMaxpoolAndPermute.forward (inputs NCHW, outputs NHWC)."""
    # NCHW -> NHWC permutes stay in XLA: each is already at its 1-read +
    # 1-write HBM traffic lower bound.
    # TODO(synk): optionally fuse the heatmap transpose into the pool kernel
    # (read NCHW, pool, transpose in-kernel) to save one HBM pass; only worth
    # it if it beats XLA's transpose for lane-sparse channel counts.
    paf_nhwc = jnp.transpose(part_affinity_fields, (0, 2, 3, 1))
    hm_nhwc = jnp.transpose(heatmap, (0, 2, 3, 1))
    mp_nhwc = _maxpool3x3_nhwc(hm_nhwc)
    return [paf_nhwc, hm_nhwc, mp_nhwc]


if __name__ == "__main__":
    key = jax.random.PRNGKey(0)
    k_hm, k_paf = jax.random.split(key)

    # Small but lane-dense shapes (W*C_hm == 128) per the perf review; H = 16
    # exercises the H-tiled path (two 8-row tiles per image -> halo logic).
    N, C_HM, C_PAF, H, W = 2, 8, 16, 16, 16
    heatmap = jax.random.normal(k_hm, (N, C_HM, H, W), dtype=jnp.float32)
    paf = jax.random.normal(k_paf, (N, C_PAF, H, W), dtype=jnp.float32)

    outs = heatmap_maxpool_and_permute(heatmap, paf)
    outs = [jax.block_until_ready(o) for o in outs]

    # Reference: MaxPool2d(3, stride=1, padding=1) == reduce_window w/ -inf pad.
    ref_mp = lax.reduce_window(
        heatmap, -jnp.inf, lax.max,
        window_dimensions=(1, 1, 3, 3),
        window_strides=(1, 1, 1, 1),
        padding=((0, 0), (0, 0), (1, 1), (1, 1)))
    ref_outs = [jnp.transpose(paf, (0, 2, 3, 1)),
                jnp.transpose(heatmap, (0, 2, 3, 1)),
                jnp.transpose(ref_mp, (0, 2, 3, 1))]

    for got, ref in zip(outs, ref_outs):
        assert got.shape == ref.shape, (got.shape, ref.shape)
        assert got.dtype == ref.dtype, (got.dtype, ref.dtype)
        assert jnp.allclose(got, ref, atol=1e-6), "mismatch vs reference"

    print("KERNEL_OK")
</pallas_src>

<mosaic_0001>
module attributes {stable_mosaic.version = 11 : i64} {
  func.func @_maxpool3x3_kernel(%arg0: i32, %arg1: i32, %arg2: memref<1x8x128xf32, #tpu.memory_space<vmem>>, %arg3: memref<1x8x128xf32, #tpu.memory_space<vmem>>, %arg4: memref<1x8x128xf32, #tpu.memory_space<vmem>>, %arg5: memref<1x8x128xf32, #tpu.memory_space<vmem>>) attributes {dimension_semantics = [#tpu.dimension_semantics<parallel>, #tpu.dimension_semantics<parallel>], iteration_bounds = array<i64: 2, 2>, scalar_prefetch = 0 : i64, scratch_operands = 0 : i64, tpu.core_type = #tpu.core_type<tc>, window_params = [{transform_indices = @transform_0, window_bounds = array<i64: 1, 8, 128>}, {transform_indices = @transform_1, window_bounds = array<i64: 1, 8, 128>}, {transform_indices = @transform_2, window_bounds = array<i64: 1, 8, 128>}, {transform_indices = @transform_3, window_bounds = array<i64: 1, 8, 128>}]} {
    %c0 = arith.constant 0 : index
    %c0_0 = arith.constant 0 : index
    %c0_1 = arith.constant 0 : index
    %0 = vector.load %arg2[%c0, %c0_0, %c0_1] : memref<1x8x128xf32, #tpu.memory_space<vmem>>, vector<1x8x128xf32>
    %1 = vector.shape_cast %0 : vector<1x8x128xf32> to vector<8x128xf32>
    %c0_i32 = arith.constant 0 : i32
    %2 = arith.cmpi eq, %arg1, %c0_i32 : i32
    %c0_2 = arith.constant 0 : index
    %c0_3 = arith.constant 0 : index
    %c0_4 = arith.constant 0 : index
    %3 = vector.load %arg3[%c0_2, %c0_3, %c0_4] : memref<1x8x128xf32, #tpu.memory_space<vmem>>, vector<1x8x128xf32>
    %4 = vector.shape_cast %3 : vector<1x8x128xf32> to vector<8x128xf32>
    %5 = vector.extract_strided_slice %4 {offsets = [7, 0], sizes = [1, 128], strides = [1, 1]} : vector<8x128xf32> to vector<1x128xf32>
    %cst = arith.constant 0xFF800000 : f32
    %6 = vector.broadcast %cst : f32 to vector<1x128xf32>
    %7 = arith.select %2, %6, %5 : vector<1x128xf32>
    %c1_i32 = arith.constant 1 : i32
    %8 = arith.cmpi eq, %arg1, %c1_i32 : i32
    %c0_5 = arith.constant 0 : index
    %c0_6 = arith.constant 0 : index
    %c0_7 = arith.constant 0 : index
    %9 = vector.load %arg4[%c0_5, %c0_6, %c0_7] : memref<1x8x128xf32, #tpu.memory_space<vmem>>, vector<1x8x128xf32>
    %10 = vector.shape_cast %9 : vector<1x8x128xf32> to vector<8x128xf32>
    %11 = vector.extract_strided_slice %10 {offsets = [0, 0], sizes = [1, 128], strides = [1, 1]} : vector<8x128xf32> to vector<1x128xf32>
    %cst_8 = arith.constant 0xFF800000 : f32
    %12 = vector.broadcast %cst_8 : f32 to vector<1x128xf32>
    %13 = arith.select %8, %12, %11 : vector<1x128xf32>
    %14 = tpu.iota {dimensions = array<i32: 0>} : vector<8x1xi32>
    %c0_i32_9 = arith.constant 0 : i32
    %15 = vector.broadcast %c0_i32_9 : i32 to vector<8x1xi32>
    %16 = arith.cmpi eq, %14, %15 : vector<8x1xi32>
    %c1_i32_10 = arith.constant 1 : i32
    %17 = tpu.dynamic_rotate %1 by %c1_i32_10 dim 0 : vector<8x128xf32>, i32 -> vector<8x128xf32>
    %18 = vector.shape_cast %16 : vector<8x1xi1> to vector<8x1xi1>
    %19 = vector.broadcast %18 : vector<8x1xi1> to vector<8x128xi1>
    %20 = vector.shape_cast %7 : vector<1x128xf32> to vector<1x128xf32>
    %21 = vector.broadcast %20 : vector<1x128xf32> to vector<8x128xf32>
    %22 = arith.select %19, %21, %17 : vector<8x128xi1>, vector<8x128xf32>
    %c7_i32 = arith.constant 7 : i32
    %23 = vector.broadcast %c7_i32 : i32 to vector<8x1xi32>
    %24 = arith.cmpi eq, %14, %23 : vector<8x1xi32>
    %c7_i32_11 = arith.constant 7 : i32
    %25 = tpu.dynamic_rotate %1 by %c7_i32_11 dim 0 : vector<8x128xf32>, i32 -> vector<8x128xf32>
    %26 = vector.shape_cast %24 : vector<8x1xi1> to vector<8x1xi1>
    %27 = vector.broadcast %26 : vector<8x1xi1> to vector<8x128xi1>
    %28 = vector.shape_cast %13 : vector<1x128xf32> to vector<1x128xf32>
    %29 = vector.broadcast %28 : vector<1x128xf32> to vector<8x128xf32>
    %30 = arith.select %27, %29, %25 : vector<8x128xi1>, vector<8x128xf32>
    %31 = arith.maximumf %22, %1 : vector<8x128xf32>
    %32 = arith.maximumf %31, %30 : vector<8x128xf32>
    %33 = tpu.iota {dimensions = array<i32: 1>} : vector<1x128xi32>
    %c8_i32 = arith.constant 8 : i32
    %34 = tpu.dynamic_rotate %32 by %c8_i32 dim 1 : vector<8x128xf32>, i32 -> vector<8x128xf32>
    %c120_i32 = arith.constant 120 : i32
    %35 = tpu.dynamic_rotate %32 by %c120_i32 dim 1 : vector<8x128xf32>, i32 -> vector<8x128xf32>
    %c8_i32_12 = arith.constant 8 : i32
    %36 = vector.broadcast %c8_i32_12 : i32 to vector<1x128xi32>
    %37 = arith.cmpi slt, %33, %36 : vector<1x128xi32>
    %cst_13 = arith.constant 0xFF800000 : f32
    %38 = vector.shape_cast %37 : vector<1x128xi1> to vector<1x128xi1>
    %39 = vector.broadcast %38 : vector<1x128xi1> to vector<8x128xi1>
    %40 = vector.broadcast %cst_13 : f32 to vector<8x128xf32>
    %41 = arith.select %39, %40, %34 : vector<8x128xi1>, vector<8x128xf32>
    %c120_i32_14 = arith.constant 120 : i32
    %42 = vector.broadcast %c120_i32_14 : i32 to vector<1x128xi32>
    %43 = arith.cmpi sge, %33, %42 : vector<1x128xi32>
    %cst_15 = arith.constant 0xFF800000 : f32
    %44 = vector.shape_cast %43 : vector<1x128xi1> to vector<1x128xi1>
    %45 = vector.broadcast %44 : vector<1x128xi1> to vector<8x128xi1>
    %46 = vector.broadcast %cst_15 : f32 to vector<8x128xf32>
    %47 = arith.select %45, %46, %35 : vector<8x128xi1>, vector<8x128xf32>
    %48 = arith.maximumf %41, %32 : vector<8x128xf32>
    %49 = arith.maximumf %48, %47 : vector<8x128xf32>
    %c0_16 = arith.constant 0 : index
    %c0_17 = arith.constant 0 : index
    %c0_18 = arith.constant 0 : index
    %50 = vector.load %arg5[%c0_16, %c0_17, %c0_18] : memref<1x8x128xf32, #tpu.memory_space<vmem>>, vector<1x8x128xf32>
    %51 = vector.shape_cast %50 : vector<1x8x128xf32> to vector<8x128xf32>
    %52 = vector.shape_cast %49 : vector<8x128xf32> to vector<1x8x128xf32>
    tpu.vector_store %arg5[%c0_16, %c0_17, %c0_18], %52 {strides = array<i32>} : memref<1x8x128xf32, #tpu.memory_space<vmem>>, vector<1x8x128xf32>,
    return
  }
  func.func @transform_0(%arg0: i32, %arg1: i32) -> (i32, i32, i32) {
    %c0_i32 = arith.constant 0 : i32
    %c0_i32_0 = arith.constant 0 : i32
    return %arg0, %arg1, %c0_i32 : i32, i32, i32
  }
  func.func @transform_1(%arg0: i32, %arg1: i32) -> (i32, i32, i32) {
    %c1_i32 = arith.constant 1 : i32
    %0 = arith.muli %arg1, %c1_i32 : i32
    %c1_i32_0 = arith.constant 1 : i32
    %1 = arith.subi %0, %c1_i32_0 : i32
    %c0_i32 = arith.constant 0 : i32
    %2 = arith.maxsi %1, %c0_i32 : i32
    %c0_i32_1 = arith.constant 0 : i32
    %c0_i32_2 = arith.constant 0 : i32
    return %arg0, %2, %c0_i32_1 : i32, i32, i32
  }
  func.func @transform_2(%arg0: i32, %arg1: i32) -> (i32, i32, i32) {
    %c1_i32 = arith.constant 1 : i32
    %0 = arith.addi %arg1, %c1_i32 : i32
    %c1_i32_0 = arith.constant 1 : i32
    %1 = arith.muli %0, %c1_i32_0 : i32
    %c1_i32_1 = arith.constant 1 : i32
    %2 = arith.minsi %1, %c1_i32_1 : i32
    %c0_i32 = arith.constant 0 : i32
    %c0_i32_2 = arith.constant 0 : i32
    return %arg0, %2, %c0_i32 : i32, i32, i32
  }
  func.func @transform_3(%arg0: i32, %arg1: i32) -> (i32, i32, i32) {
    %c0_i32 = arith.constant 0 : i32
    %c0_i32_0 = arith.constant 0 : i32
    return %arg0, %arg1, %c0_i32 : i32, i32, i32
  }
}

</mosaic_0001>

<llo_original>
// kernel: heatmap_maxpool_and_permute.1
$region0: #{heatmap_maxpool_and_permute.1}
  #allocation0 [shape = 'u32[]', space=smem, size = 0x4, offset = 0x4, fixed_abs, tag = 'smem constant byte address 0x4 - core index']
  #allocation1 [shape = 'u32[144,128]{1,0:T(1,128)}', space=vmem, size = 0x12000, scoped, tag = 'internal scratch']
  %s0 = inlined_call_operand.vmem [shape: f32[2,16,128], index: 0, kind: input, shape index: {}, may-alias: {0,1,2}]
  %s1 = inlined_call_operand.vmem [shape: f32[2,16,128], index: 1, kind: input, shape index: {}, may-alias: {0,1,2}]
  %s2 = inlined_call_operand.vmem [shape: f32[2,16,128], index: 2, kind: input, shape index: {}, may-alias: {0,1,2}]
  %s3 = inlined_call_operand.vmem [shape: f32[2,16,128], index: 3, kind: output, shape index: {}]
  %s4 = sld [smem:[#allocation0]]
  $region45: #{heatmap_maxpool_and_permute.1} parent=0
    _
  %s6 = ssub.s32 1, %s4
  %s7 = scalar_select 0, %s6, %s4
  loop: start=0, step=1, limit=6
  $region2: #{heatmap_maxpool_and_permute.1} parent=0 // loop_pre_header
    _
  $region3: #{heatmap_maxpool_and_permute.1} parent=0 // loop_header
    %s9 = sphi 0, %s13
    %p10 = scmp.ge.s32.totalorder %s9, 6
    %s16 = sphi 0, %s28
    %s17 = sphi 0, %s24
    %s18 = sphi 0, %s16
    %s19 = sphi 0, %s17
    %s20 = sphi 0, %s18
    %s21 = sphi 0, %s19
    %s33 = sphi 0, %s35
    %s36 = sphi 0, %s33
    %s37 = sphi 0, %s36
    %s53 = sphi 0, %s37
    %s67 = sphi 0, %s69
    %s70 = sphi 0, %s67
    %s71 = sphi 0, %s70
    %s87 = sphi 0, %s71
    %s101 = sphi 0, %s103
    %s104 = sphi 0, %s101
    %s105 = sphi 0, %s104
    %s121 = sphi 0, %s105
    %s129 = sphi 0, %s131
    %s132 = sphi 0, %s129
    %s133 = sphi 0, %s132
    %s149 = sphi 0, %s133
  $region4: #{heatmap_maxpool_and_permute.1} parent=0 // loop_header_branch
    %12 = sbr.rel (%p10) target = $region8
  $region5: #{heatmap_maxpool_and_permute.1} parent=0 // loop_body
    %s14 = ssub.s32 %s9, 1
    %s15 = ssub.s32 %s9, 2
    %s22 = sadd.s32 1, %s17
    %p23 = scmp.ge.s32.totalorder %s22, 2
    %s24 = scalar_select %p23, 0, %s22
    %s25 = sadd.s32 1, %s16
    %s26 = scalar_select %p23, %s25, %s16
    %p27 = scmp.ge.s32.totalorder %s26, 2
    %s28 = scalar_select %p27, 0, %s26
    %s29 = ssub.s32 %s16, %s28
    %s30 = ssub.s32 %s17, %s24
    %s31 = sor.u32 %s29, %s30
    %p32 = scmp.eq.s32.totalorder %s31, 0
    %s34 = sadd.s32 %s33, 1
    %s35 = scalar_select %p32, %s33, %s34
    %p38 = pneg %p32
    %p39 = scmp.eq.s32.totalorder %s9, 3
    %p40 = por %p38, %p39
    %p41 = scmp.ne.s32.totalorder %s33, %s36
    %p42 = scmp.eq.s32.totalorder %s9, 0
    %p43 = por %p41, %p42
    %p44 = scmp.ne.s32.totalorder %s33, %s36
    %p45 = scmp.eq.s32.totalorder %s14, 3
    %p46 = por %p44, %p45
    %p47 = scmp.ne.s32.totalorder %s36, %s37
    %p48 = scmp.eq.s32.totalorder %s14, 0
    %p49 = por %p47, %p48
    %p50 = scmp.ne.s32.totalorder %s36, %s37
    %p51 = scmp.eq.s32.totalorder %s15, 3
    %p52 = por %p50, %p51
    %p54 = scmp.ne.s32.totalorder %s37, %s53
    %p55 = scmp.eq.s32.totalorder %s15, 0
    %p56 = por %p54, %p55
    %s57 = ssub.s32 %s17, 1
    %p58 = scmp.gt.s32.totalorder %s57, 0
    %s59 = scalar_select %p58, %s57, 0
    %s60 = ssub.s32 %s24, 1
    %p61 = scmp.gt.s32.totalorder %s60, 0
    %s62 = scalar_select %p61, %s60, 0
    %s63 = ssub.s32 %s16, %s28
    %s64 = ssub.s32 %s59, %s62
    %s65 = sor.u32 %s63, %s64
    %p66 = scmp.eq.s32.totalorder %s65, 0
    %s68 = sadd.s32 %s67, 1
    %s69 = scalar_select %p66, %s67, %s68
    %p72 = pneg %p66
    %p73 = scmp.eq.s32.totalorder %s9, 3
    %p74 = por %p72, %p73
    %p75 = scmp.ne.s32.totalorder %s67, %s70
    %p76 = scmp.eq.s32.totalorder %s9, 0
    %p77 = por %p75, %p76
    %p78 = scmp.ne.s32.totalorder %s67, %s70
    %p79 = scmp.eq.s32.totalorder %s14, 3
    %p80 = por %p78, %p79
    %p81 = scmp.ne.s32.totalorder %s70, %s71
    %p82 = scmp.eq.s32.totalorder %s14, 0
    %p83 = por %p81, %p82
    %p84 = scmp.ne.s32.totalorder %s70, %s71
    %p85 = scmp.eq.s32.totalorder %s15, 3
    %p86 = por %p84, %p85
    %p88 = scmp.ne.s32.totalorder %s71, %s87
    %p89 = scmp.eq.s32.totalorder %s15, 0
    %p90 = por %p88, %p89
    %s91 = sadd.s32 %s17, 1
    %p92 = scmp.lt.s32.totalorder %s91, 1
    %s93 = scalar_select %p92, %s91, 1
    %s94 = sadd.s32 %s24, 1
    %p95 = scmp.lt.s32.totalorder %s94, 1
    %s96 = scalar_select %p95, %s94, 1
    %s97 = ssub.s32 %s16, %s28
    %s98 = ssub.s32 %s93, %s96
    %s99 = sor.u32 %s97, %s98
    %p100 = scmp.eq.s32.totalorder %s99, 0
    %s102 = sadd.s32 %s101, 1
    %s103 = scalar_select %p100, %s101, %s102
    %p106 = pneg %p100
    %p107 = scmp.eq.s32.totalorder %s9, 3
    %p108 = por %p106, %p107
    %p109 = scmp.ne.s32.totalorder %s101, %s104
    %p110 = scmp.eq.s32.totalorder %s9, 0
    %p111 = por %p109, %p110
    %p112 = scmp.ne.s32.totalorder %s101, %s104
    %p113 = scmp.eq.s32.totalorder %s14, 3
    %p114 = por %p112, %p113
    %p115 = scmp.ne.s32.totalorder %s104, %s105
    %p116 = scmp.eq.s32.totalorder %s14, 0
    %p117 = por %p115, %p116
    %p118 = scmp.ne.s32.totalorder %s104, %s105
    %p119 = scmp.eq.s32.totalorder %s15, 3
    %p120 = por %p118, %p119
    %p122 = scmp.ne.s32.totalorder %s105, %s121
    %p123 = scmp.eq.s32.totalorder %s15, 0
    %p124 = por %p122, %p123
    %s125 = ssub.s32 %s16, %s28
    %s126 = ssub.s32 %s17, %s24
    %s127 = sor.u32 %s125, %s126
    %p128 = scmp.eq.s32.totalorder %s127, 0
    %s130 = sadd.s32 %s129, 1
    %s131 = scalar_select %p128, %s129, %s130
    %p134 = pneg %p128
    %p135 = scmp.eq.s32.totalorder %s9, 3
    %p136 = por %p134, %p135
    %p137 = scmp.ne.s32.totalorder %s129, %s132
    %p138 = scmp.eq.s32.totalorder %s9, 0
    %p139 = por %p137, %p138
    %p140 = scmp.ne.s32.totalorder %s129, %s132
    %p141 = scmp.eq.s32.totalorder %s14, 3
    %p142 = por %p140, %p141
    %p143 = scmp.ne.s32.totalorder %s132, %s133
    %p144 = scmp.eq.s32.totalorder %s14, 0
    %p145 = por %p143, %p144
    %p146 = scmp.ne.s32.totalorder %s132, %s133
    %p147 = scmp.eq.s32.totalorder %s15, 3
    %p148 = por %p146, %p147
    %p150 = scmp.ne.s32.totalorder %s133, %s149
    %p151 = scmp.eq.s32.totalorder %s15, 0
    %p152 = por %p150, %p151
    %p153 = scmp.le.s32.totalorder 1, %s9
    %p154 = scmp.lt.s32.totalorder %s9, 5
    %p155 = pnand %p153, %p154
    %p156 = pneg %p155
    // Predicated region
    $region9: #{heatmap_maxpool_and_permute.1} parent=5 // pred_check
      _
    $region10: #{heatmap_maxpool_and_permute.1} parent=5 // pred_check_branch
      %158 = sbr.rel (%p155) target = $region12
    $region11: #{heatmap_maxpool_and_permute.1} parent=5 // pred_region
      %s159 = ssub.s32 %s9, 1
    $region12: #{heatmap_maxpool_and_permute.1} parent=5 // pred_fallthru
      _
    %p160 = scmp.lt.s32.totalorder %s9, 4
    // Predicated region
    $region13: #{heatmap_maxpool_and_permute.1} parent=5 // pred_check
      %p161 = pneg %p160
    $region14: #{heatmap_maxpool_and_permute.1} parent=5 // pred_check_branch
      %163 = sbr.rel (%p161) target = $region16
    $region15: #{heatmap_maxpool_and_permute.1} parent=5 // pred_region
      // Predicated region
      $region17: #{heatmap_maxpool_and_permute.1} parent=15 // pred_check
        %p164 = pneg %p43
      $region18: #{heatmap_maxpool_and_permute.1} parent=15 // pred_check_branch
        %166 = sbr.rel (%p164) target = $region20
      $region19: #{heatmap_maxpool_and_permute.1} parent=15 // pred_region
        %p167 = scmp.lt.s32.totalorder %s16, 1
        %s168 = scalar_select %p167, %s16, 1
        %p169 = scmp.lt.s32.totalorder %s17, 1
        %s170 = scalar_select %p169, %s17, 1
        %s171 = smul.addr %s168, 2
        %s172 = sadd.s32 %s170, %s171
        %s173 = smul.addr %s172, 8
        %s174 = scalar_lea.vmem %s0, %s173
      $region20: #{heatmap_maxpool_and_permute.1} parent=15 // pred_fallthru
        _
      // Predicated region
      $region21: #{heatmap_maxpool_and_permute.1} parent=15 // pred_check
        %p175 = pneg %p77
      $region22: #{heatmap_maxpool_and_permute.1} parent=15 // pred_check_branch
        %177 = sbr.rel (%p175) target = $region24
      $region23: #{heatmap_maxpool_and_permute.1} parent=15 // pred_region
        %s178 = ssub.s32 %s17, 1
        %p179 = scmp.gt.s32.totalorder %s178, 0
        %s180 = scalar_select %p179, %s178, 0
        %p181 = scmp.lt.s32.totalorder %s16, 1
        %s182 = scalar_select %p181, %s16, 1
        %p183 = scmp.lt.s32.totalorder %s180, 1
        %s184 = scalar_select %p183, %s180, 1
        %s185 = smul.addr %s182, 2
        %s186 = sadd.s32 %s184, %s185
        %s187 = smul.addr %s186, 8
        %s188 = scalar_lea.vmem %s1, %s187
        %s189 = ssub.s32 %s17, 1
        %p190 = scmp.gt.s32.totalorder %s189, 0
        %s191 = scalar_select %p190, %s189, 0
      $region24: #{heatmap_maxpool_and_permute.1} parent=15 // pred_fallthru
        _
      // Predicated region
      $region25: #{heatmap_maxpool_and_permute.1} parent=15 // pred_check
        %p192 = pneg %p111
      $region26: #{heatmap_maxpool_and_permute.1} parent=15 // pred_check_branch
        %194 = sbr.rel (%p192) target = $region28
      $region27: #{heatmap_maxpool_and_permute.1} parent=15 // pred_region
        %s195 = sadd.s32 %s17, 1
        %p196 = scmp.lt.s32.totalorder %s195, 1
        %s197 = scalar_select %p196, %s195, 1
        %p198 = scmp.lt.s32.totalorder %s16, 1
        %s199 = scalar_select %p198, %s16, 1
        %p200 = scmp.lt.s32.totalorder %s197, 1
        %s201 = scalar_select %p200, %s197, 1
        %s202 = smul.addr %s199, 2
        %s203 = sadd.s32 %s201, %s202
        %s204 = smul.addr %s203, 8
        %s205 = scalar_lea.vmem %s2, %s204
        %s206 = sadd.s32 %s17, 1
        %p207 = scmp.lt.s32.totalorder %s206, 1
        %s208 = scalar_select %p207, %s206, 1
      $region28: #{heatmap_maxpool_and_permute.1} parent=15 // pred_fallthru
        _
    $region16: #{heatmap_maxpool_and_permute.1} parent=5 // pred_fallthru
      _
    %p209 = scmp.le.s32.totalorder 1, %s9
    %p210 = scmp.lt.s32.totalorder %s9, 5
    %p211 = pnand %p209, %p210
    %p212 = pneg %p211
    // Predicated region
    $region29: #{heatmap_maxpool_and_permute.1} parent=5 // pred_check
      _
    $region30: #{heatmap_maxpool_and_permute.1} parent=5 // pred_check_branch
      %214 = sbr.rel (%p211) target = $region32
    $region31: #{heatmap_maxpool_and_permute.1} parent=5 // pred_region
      %s215 = ssub.s32 %s9, 1
      %p216 = scmp.lt.s32.totalorder %s18, 1
      %s217 = scalar_select %p216, %s18, 1
      %p218 = scmp.lt.s32.totalorder %s19, 1
      %s219 = scalar_select %p218, %s19, 1
      %s220 = smul.addr %s217, 2
      %s221 = sadd.s32 %s219, %s220
      %s222 = smul.addr %s221, 8
      %s223 = scalar_lea.vmem %s0, %s222
      %p224 = pneg %p49
      %p225 = pneg %p46
      %s226 = ssub.s32 %s19, 1
      %p227 = scmp.gt.s32.totalorder %s226, 0
      %s228 = scalar_select %p227, %s226, 0
      %p229 = scmp.lt.s32.totalorder %s18, 1
      %s230 = scalar_select %p229, %s18, 1
      %p231 = scmp.lt.s32.totalorder %s228, 1
      %s232 = scalar_select %p231, %s228, 1
      %s233 = smul.addr %s230, 2
      %s234 = sadd.s32 %s232, %s233
      %s235 = smul.addr %s234, 8
      %s236 = scalar_lea.vmem %s1, %s235
      %p237 = pneg %p83
      %p238 = pneg %p80
      %s239 = sadd.s32 %s19, 1
      %p240 = scmp.lt.s32.totalorder %s239, 1
      %s241 = scalar_select %p240, %s239, 1
      %p242 = scmp.lt.s32.totalorder %s18, 1
      %s243 = scalar_select %p242, %s18, 1
      %p244 = scmp.lt.s32.totalorder %s241, 1
      %s245 = scalar_select %p244, %s241, 1
      %s246 = smul.addr %s243, 2
      %s247 = sadd.s32 %s245, %s246
      %s248 = smul.addr %s247, 8
      %s249 = scalar_lea.vmem %s2, %s248
      %p250 = pneg %p117
      %p251 = pneg %p114
      %p252 = pneg %p145
      %p253 = pneg %p142
      %p254 = scmp.lt.s32.totalorder %s18, 1
      %s255 = scalar_select %p254, %s18, 1
      %p256 = scmp.lt.s32.totalorder %s19, 1
      %s257 = scalar_select %p256, %s19, 1
      %s258 = smul.addr %s255, 2
      %s259 = sadd.s32 %s257, %s258
      %s260 = smul.addr %s259, 8
      %s261 = scalar_lea.vmem %s3, %s260
      %p262 = scmp.lt.s32.totalorder %s18, 1
      %s263 = scalar_select %p262, %s18, 1
      %p264 = scmp.lt.s32.totalorder %s19, 1
      %s265 = scalar_select %p264, %s19, 1
      %s266 = smul.addr %s263, 2
      %s267 = sadd.s32 %s265, %s266
      %s268 = smul.addr %s267, 8
      %s269 = scalar_lea.vmem %s0, %s268
      %s270 = ssub.s32 %s19, 1
      %p271 = scmp.gt.s32.totalorder %s270, 0
      %s272 = scalar_select %p271, %s270, 0
      %p273 = scmp.lt.s32.totalorder %s18, 1
      %s274 = scalar_select %p273, %s18, 1
      %p275 = scmp.lt.s32.totalorder %s272, 1
      %s276 = scalar_select %p275, %s272, 1
      %s277 = smul.addr %s274, 2
      %s278 = sadd.s32 %s276, %s277
      %s279 = smul.addr %s278, 8
      %s280 = scalar_lea.vmem %s1, %s279
      %s281 = ssub.s32 %s19, 1
      %p282 = scmp.gt.s32.totalorder %s281, 0
      %s283 = scalar_select %p282, %s281, 0
      %s284 = sadd.s32 %s19, 1
      %p285 = scmp.lt.s32.totalorder %s284, 1
      %s286 = scalar_select %p285, %s284, 1
      %p287 = scmp.lt.s32.totalorder %s18, 1
      %s288 = scalar_select %p287, %s18, 1
      %p289 = scmp.lt.s32.totalorder %s286, 1
      %s290 = scalar_select %p289, %s286, 1
      %s291 = smul.addr %s288, 2
      %s292 = sadd.s32 %s290, %s291
      %s293 = smul.addr %s292, 8
      %s294 = scalar_lea.vmem %s2, %s293
      %s295 = sadd.s32 %s19, 1
      %p296 = scmp.lt.s32.totalorder %s295, 1
      %s297 = scalar_select %p296, %s295, 1
      %p298 = scmp.lt.s32.totalorder %s18, 1
      %s299 = scalar_select %p298, %s18, 1
      %p300 = scmp.lt.s32.totalorder %s19, 1
      %s301 = scalar_select %p300, %s19, 1
      %s302 = smul.addr %s299, 2
      %s303 = sadd.s32 %s301, %s302
      %s304 = smul.addr %s303, 8
      %s305 = scalar_lea.vmem %s3, %s304
      %v306 = vld [vmem:[%s269] sm:$0xff]
      %p307 = scmp.eq.s32.totalorder %s19, 0
      %v308 = vld [vmem:[%s280] sm:$0xff]
      %s309 = scalar_select %p307, 1, 0
      %v310 = vstv %s309
      %vm311 = vcmp.eq.s32.totalorder %v310, 1
      %v312 = vsel %vm311, -inf, %v308
      %p313 = scmp.eq.s32.totalorder %s19, 1
      %v314 = vld [vmem:[%s294] sm:$0xff]
      %s315 = scalar_select %p313, 1, 0
      %v316 = vstv %s315
      %vm317 = vcmp.eq.s32.totalorder %v316, 1
      %v318 = vsel %vm317, -inf, %v314
      %v319 = vlaneseq
      %v320 = vshrl.u32 %v319, 7
      %vm321 = vcmp.eq.s32.totalorder %v320, 0
      %v322 = vrot.slane %v306, 7
      %v323 = vsel %vm321, 1, 0
      %vm324 = vcmp.eq.s32.totalorder %v323, 1
      %v325 = vlaneseq
      %v326 = vshrl.u32 %v325, 7
      %v327 = vsub.s32 7, %v326
      %v328 = vrot.slane %v312, %v327
      %v329 = vsel %vm324, %v328, %v322
      %vm330 = vcmp.eq.s32.totalorder %v320, 7
      %v331 = vrot.slane %v306, 1
      %v332 = vsel %vm330, 1, 0
      %vm333 = vcmp.eq.s32.totalorder %v332, 1
      %v334 = vlaneseq
      %v335 = vshrl.u32 %v334, 7
      %v336 = vsub.s32 0, %v335
      %v337 = vrot.slane %v318, %v336
      %v338 = vsel %vm333, %v337, %v331
      %v339 = vmax.f32 %v329, %v306
      %v340 = vmax.f32 %v339, %v338
      %v341 = vlaneseq
      %v342 = vand.u32 %v341, 127
      %343 = vrot.lane.b32.xlu0 %v340, 8
      %v344 = vpop.permute.xlu0 %343
      %345 = vrot.lane.b32.xlu0 %v340, 120
      %v346 = vpop.permute.xlu0 %345
      %vm347 = vcmp.lt.s32.totalorder %v342, 8
      %v348 = vsel %vm347, 1, 0
      %vm349 = vcmp.eq.s32.totalorder %v348, 1
      %v350 = vsel %vm349, -inf, %v344
      %vm351 = vcmp.ge.s32.totalorder %v342, 120
      %v352 = vsel %vm351, 1, 0
      %vm353 = vcmp.eq.s32.totalorder %v352, 1
      %v354 = vsel %vm353, -inf, %v346
      %v355 = vmax.f32 %v350, %v340
      %v356 = vmax.f32 %v355, %v354
      %357 = vst [vmem:[%s305] sm:$0xff] %v356
      %p358 = scmp.lt.s32.totalorder %s18, 1
      %s359 = scalar_select %p358, %s18, 1
      %p360 = scmp.lt.s32.totalorder %s19, 1
      %s361 = scalar_select %p360, %s19, 1
      %s362 = smul.addr %s359, 2
      %s363 = sadd.s32 %s361, %s362
      %s364 = smul.addr %s363, 8
      %s365 = scalar_lea.vmem %s3, %s364
      // Predicated region
      $region33: #{heatmap_maxpool_and_permute.1} parent=31 // pred_check
        %p366 = pneg %p142
      $region34: #{heatmap_maxpool_and_permute.1} parent=31 // pred_check_branch
        %368 = sbr.rel (%p366) target = $region36
      $region35: #{heatmap_maxpool_and_permute.1} parent=31 // pred_region
        _
      $region36: #{heatmap_maxpool_and_permute.1} parent=31 // pred_fallthru
        _
    $region32: #{heatmap_maxpool_and_permute.1} parent=5 // pred_fallthru
      _
    %p369 = scmp.le.s32.totalorder 2, %s9
    // Predicated region
    $region37: #{heatmap_maxpool_and_permute.1} parent=5 // pred_check
      %p370 = pneg %p369
    $region38: #{heatmap_maxpool_and_permute.1} parent=5 // pred_check_branch
      %372 = sbr.rel (%p370) target = $region40
    $region39: #{heatmap_maxpool_and_permute.1} parent=5 // pred_region
      %s373 = ssub.s32 %s9, 2
      // Predicated region
      $region41: #{heatmap_maxpool_and_permute.1} parent=39 // pred_check
        %p374 = pneg %p148
      $region42: #{heatmap_maxpool_and_permute.1} parent=39 // pred_check_branch
        %376 = sbr.rel (%p374) target = $region44
      $region43: #{heatmap_maxpool_and_permute.1} parent=39 // pred_region
        %p377 = scmp.lt.s32.totalorder %s20, 1
        %s378 = scalar_select %p377, %s20, 1
        %p379 = scmp.lt.s32.totalorder %s21, 1
        %s380 = scalar_select %p379, %s21, 1
        %s381 = smul.addr %s378, 2
        %s382 = sadd.s32 %s380, %s381
        %s383 = smul.addr %s382, 8
        %s384 = scalar_lea.vmem %s3, %s383
      $region44: #{heatmap_maxpool_and_permute.1} parent=39 // pred_fallthru
        _
    $region40: #{heatmap_maxpool_and_permute.1} parent=5 // pred_fallthru
      _
  $region6: #{heatmap_maxpool_and_permute.1} parent=0 // loop_footer
    %s13 = sadd.s32 1, %s9
  $region7: #{heatmap_maxpool_and_permute.1} parent=0 // loop_footer_branch
    %8 = sbr.rel target = $region3
  $region8: #{heatmap_maxpool_and_permute.1} parent=0 // loop_exit
    _

</llo_original>
